<compile_context>
chip_gen: v7x
topology: tpu7x:2x2x1
jax: 0.10.0
libtpu: 0.0.40
codegen_flags: <defaults>
</compile_context>

<pallas_src>
import functools

import numpy as np
import jax
import jax.numpy as jnp
from jax.experimental import pallas as pl
from jax.experimental.pallas import tpu as pltpu

_SUB = 8  # f32 sublanes per vreg


def sigmoid_rampup(current, rampup_length):
    """Exponential rampup (host-side scalar, identical to the PyTorch helper)."""
    if rampup_length == 0:
        return 1.0
    current = np.clip(current, 0.0, rampup_length)
    phase = 1.0 - current / rampup_length
    return float(np.exp(-5.0 * phase * phase))


def _round_up(x, m):
    return ((x + m - 1) // m) * m


def _tile_plan(n, block_n, core_split):
    """Return (lanes_per_tile, n_padded, tiles_per_split, core_split)."""
    if n <= block_n:
        n_pad = _round_up(n, _SUB)
        return n_pad // _SUB, n_pad, 1, 1
    assert block_n % (_SUB * 128) == 0, "block_n must be a multiple of 1024"
    n_pad = _round_up(n, core_split * block_n)
    return block_n // _SUB, n_pad, n_pad // (core_split * block_n), core_split


# ---------------------------------------------------------------------------
# Weighted cross-entropy with ignore_index=-100
# ---------------------------------------------------------------------------
def _ce_kernel(logits_ref, target_ref, weight_ref, num_ref, den_ref):
    """Weighted-CE partial sums over one lane-dense batch tile.

    logits_ref : (C, 8, TL)   VMEM  -- class-major slab, batch on (sublane, lane)
    target_ref : (8, TL) i32  VMEM
    weight_ref : (C,)    f32  SMEM  -- per-class weights
    num_ref    : (8, 128) f32 VMEM  -- per-split partial numerator (replicated)
    den_ref    : (8, 128) f32 VMEM  -- per-split partial denominator (replicated)
    """
    i = pl.program_id(1)
    n_cls = logits_ref.shape[0]

    @pl.when(i == 0)
    def _():
        num_ref[...] = jnp.zeros_like(num_ref)
        den_ref[...] = jnp.zeros_like(den_ref)

    xs = [logits_ref[c].astype(jnp.float32) for c in range(n_cls)]  # C x (8, TL)
    tgt = target_ref[...]                                           # (8, TL)

    # running max over the tiny class axis (pure VPU, unrolled)
    m = xs[0]
    for c in range(1, n_cls):
        m = jnp.maximum(m, xs[c])

    # single fused pass: sum-exp + gather target logit + gather class weight
    s = jnp.zeros_like(m)
    picked = jnp.zeros_like(m)
    w_i = jnp.zeros_like(m)
    for c in range(n_cls):
        s = s + jnp.exp(xs[c] - m)
        hit = tgt == c
        picked = jnp.where(hit, xs[c], picked)
        w_i = jnp.where(hit, weight_ref[c], w_i)
    # targets hitting no class (ignore_index=-100 and batch padding) keep
    # w_i == 0 and drop out of both numerator and denominator.

    lse = jnp.log(s) + m
    contrib = (lse - picked) * w_i
    num_ref[...] += jnp.sum(jnp.sum(contrib, axis=1, keepdims=True),
                            axis=0, keepdims=True)
    den_ref[...] += jnp.sum(jnp.sum(w_i, axis=1, keepdims=True),
                            axis=0, keepdims=True)


def cross_entropy_loss_pallas(logits, target, weight, *,
                              block_n=65536, core_split=2):
    """F.cross_entropy(logits, target, weight=weight, ignore_index=-100)."""
    n, n_cls = logits.shape
    tl, n_pad, tiles, splits = _tile_plan(n, block_n, core_split)
    lanes = n_pad // _SUB

    logits_t = logits.T                                  # (C, N), keep input dtype
    target_i = target.astype(jnp.int32)
    if n_pad != n:
        logits_t = jnp.pad(logits_t, ((0, 0), (0, n_pad - n)))
        target_i = jnp.pad(target_i, (0, n_pad - n), constant_values=-100)
    logits_s = logits_t.reshape(n_cls, _SUB, lanes)      # batch -> (sublane, lane)
    target_s = target_i.reshape(_SUB, lanes)
    weight_f = weight.astype(jnp.float32).reshape(n_cls)

    lane_map = lambda g, i: (0, 0, g * tiles + i)
    tgt_map = lambda g, i: (0, g * tiles + i)
    part_map = lambda g, i: (g, 0)

    num_out, den_out = pl.pallas_call(
        _ce_kernel,
        grid=(splits, tiles),
        in_specs=[
            pl.BlockSpec((n_cls, _SUB, tl), lane_map),
            pl.BlockSpec((_SUB, tl), tgt_map),
            pl.BlockSpec(memory_space=pltpu.MemorySpace.SMEM),
        ],
        out_specs=(
            pl.BlockSpec((_SUB, 128), part_map),
            pl.BlockSpec((_SUB, 128), part_map),
        ),
        out_shape=(
            jax.ShapeDtypeStruct((splits * _SUB, 128), jnp.float32),
            jax.ShapeDtypeStruct((splits * _SUB, 128), jnp.float32),
        ),
        compiler_params=pltpu.CompilerParams(
            dimension_semantics=("parallel", "arbitrary")),
    )(logits_s, target_s, weight_f)

    num = jnp.sum(num_out[::_SUB, 0])
    den = jnp.sum(den_out[::_SUB, 0])
    return num / den  # NaN if every target is ignored (matches PyTorch)


# ---------------------------------------------------------------------------
# Unsupervised consistency loss: MSE(onehot(argmax softmax(ow)), softmax(ou))
# ---------------------------------------------------------------------------
def _mse_consistency_kernel(ow_ref, ou_ref, sse_ref, *,
                            n_valid, lanes, tile_l, tiles):
    """Partial sum of squared error over one lane-dense batch tile."""
    g = pl.program_id(0)
    i = pl.program_id(1)
    n_cls = ow_ref.shape[0]

    @pl.when(i == 0)
    def _():
        sse_ref[...] = jnp.zeros_like(sse_ref)

    xw = [ow_ref[c].astype(jnp.float32) for c in range(n_cls)]  # weak-aug logits
    xu = [ou_ref[c].astype(jnp.float32) for c in range(n_cls)]  # strong-aug logits
    shape = xw[0].shape                                         # (8, TL)

    # mask padded batch slots (original index = sublane * lanes + global lane)
    lane = (g * tiles + i) * tile_l + jax.lax.broadcasted_iota(jnp.int32, shape, 1)
    row = jax.lax.broadcasted_iota(jnp.int32, shape, 0)
    mask = ((row * lanes + lane) < n_valid).astype(jnp.float32)

    # pseudo-label: argmax over classes (softmax is monotone -> argmax of logits)
    mw = xw[0]
    idx = jnp.zeros(shape, jnp.int32)
    for c in range(1, n_cls):
        newer = xw[c] > mw
        mw = jnp.where(newer, xw[c], mw)
        idx = jnp.where(newer, c, idx)

    # softmax(output_u), unrolled over the class axis
    mu = xu[0]
    for c in range(1, n_cls):
        mu = jnp.maximum(mu, xu[c])
    e = [jnp.exp(xu[c] - mu) for c in range(n_cls)]
    s = e[0]
    for c in range(1, n_cls):
        s = s + e[c]
    inv_s = 1.0 / s

    sq = jnp.zeros(shape, jnp.float32)
    for c in range(n_cls):
        d = (idx == c).astype(jnp.float32) - e[c] * inv_s
        sq = sq + d * d
    sq = sq * mask

    sse_ref[...] += jnp.sum(jnp.sum(sq, axis=1, keepdims=True),
                            axis=0, keepdims=True)


def mse_consistency_loss_pallas(output_u_w, output_u, *,
                                block_n=65536, core_split=2):
    """F.mse_loss(onehot(argmax(softmax(output_u_w))), softmax(output_u))."""
    assert output_u_w.shape == output_u.shape
    n, n_cls = output_u.shape
    tl, n_pad, tiles, splits = _tile_plan(n, block_n, core_split)
    lanes = n_pad // _SUB

    ow_t = output_u_w.T
    ou_t = output_u.T
    if n_pad != n:
        pad = ((0, 0), (0, n_pad - n))
        ow_t = jnp.pad(ow_t, pad)
        ou_t = jnp.pad(ou_t, pad)
    ow_s = ow_t.reshape(n_cls, _SUB, lanes)
    ou_s = ou_t.reshape(n_cls, _SUB, lanes)

    lane_map = lambda g, i: (0, 0, g * tiles + i)
    part_map = lambda g, i: (g, 0)

    sse = pl.pallas_call(
        functools.partial(_mse_consistency_kernel,
                          n_valid=n, lanes=lanes, tile_l=tl, tiles=tiles),
        grid=(splits, tiles),
        in_specs=[
            pl.BlockSpec((n_cls, _SUB, tl), lane_map),
            pl.BlockSpec((n_cls, _SUB, tl), lane_map),
        ],
        out_specs=pl.BlockSpec((_SUB, 128), part_map),
        out_shape=jax.ShapeDtypeStruct((splits * _SUB, 128), jnp.float32),
        compiler_params=pltpu.CompilerParams(
            dimension_semantics=("parallel", "arbitrary")),
    )(ow_s, ou_s)

    return jnp.sum(sse[::_SUB, 0]) / (n * n_cls)


# ---------------------------------------------------------------------------
# Full semi_loss2 forward
# ---------------------------------------------------------------------------
def semi_loss2_forward(current, output, output_u_w, output_u, target, weight,
                       *, block_n=65536, core_split=2):
    """Pallas-TPU forward of semi_loss2.forward(current, output, output_u_w,
    output_u, target).

    NOTE: the PyTorch module's num_classes default (10) is inconsistent with its
    3-element class-weight default; F.mse_loss requires the one-hot width to
    match output_u's class dim, so num_classes is taken from the logits' shape.
    """
    ce = cross_entropy_loss_pallas(output, target, weight,
                                   block_n=block_n, core_split=core_split)
    if output_u_w is None:
        return ce
    lu = mse_consistency_loss_pallas(output_u_w, output_u,
                                     block_n=block_n, core_split=core_split)
    return ce + sigmoid_rampup(current, 10) * lu


# ---------------------------------------------------------------------------
# Pure-JAX references (for validation)
# ---------------------------------------------------------------------------
def _ce_ref(logits, target, weight):
    logits = logits.astype(jnp.float32)
    lse = jax.nn.logsumexp(logits, axis=-1)
    valid = target != -100
    safe_t = jnp.where(valid, target, 0)
    picked = jnp.take_along_axis(logits, safe_t[:, None], axis=-1)[:, 0]
    w_i = weight[safe_t] * valid.astype(jnp.float32)
    return jnp.sum((lse - picked) * w_i) / jnp.sum(w_i)


def _mse_ref(output_u_w, output_u):
    pseudo = jax.nn.softmax(output_u_w.astype(jnp.float32), axis=-1)
    onehot = jax.nn.one_hot(jnp.argmax(pseudo, axis=-1), output_u.shape[-1],
                            dtype=jnp.float32)
    return jnp.mean((onehot - jax.nn.softmax(output_u.astype(jnp.float32),
                                             axis=-1)) ** 2)


def _semi_loss2_ref(current, output, output_u_w, output_u, target, weight):
    ce = _ce_ref(output, target, weight)
    if output_u_w is None:
        return ce
    return ce + sigmoid_rampup(current, 10) * _mse_ref(output_u_w, output_u)


if __name__ == "__main__":
    key = jax.random.PRNGKey(0)
    n_cls = 3            # len(default class weights) -> effective num_classes
    n_lab, n_unlab = 8, 16
    current = 5          # epoch fed to sigmoid_rampup(current, 10)
    weight = jnp.array([1.0 / 561, 1.0 / 835, 1.0 / 522], dtype=jnp.float32)

    k1, k2, k3, k4 = jax.random.split(key, 4)
    output = jax.random.normal(k1, (n_lab, n_cls), dtype=jnp.float32)
    target = jax.random.randint(k2, (n_lab,), 0, n_cls, dtype=jnp.int32)
    target = target.at[3].set(-100)                    # exercise ignore_index
    output_u_w = jax.random.normal(k3, (n_unlab, n_cls), dtype=jnp.float32)
    output_u = jax.random.normal(k4, (n_unlab, n_cls), dtype=jnp.float32)

    loss = semi_loss2_forward(current, output, output_u_w, output_u, target, weight)
    loss = jax.block_until_ready(loss)
    ref = _semi_loss2_ref(current, output, output_u_w, output_u, target, weight)
    assert jnp.allclose(loss, ref, rtol=1e-5, atol=1e-5), (loss, ref)

    # also exercise the tiled / megacore-split / padded path with small tiles
    k5, k6, k7, k8 = jax.random.split(jax.random.PRNGKey(1), 4)
    n_big = 3000
    output_b = jax.random.normal(k5, (n_big, n_cls), dtype=jnp.float32)
    target_b = jax.random.randint(k6, (n_big,), 0, n_cls, dtype=jnp.int32)
    target_b = target_b.at[::7].set(-100)
    ow_b = jax.random.normal(k7, (n_big, n_cls), dtype=jnp.float32)
    ou_b = jax.random.normal(k8, (n_big, n_cls), dtype=jnp.float32)

    loss_b = semi_loss2_forward(current, output_b, ow_b, ou_b, target_b, weight,
                                block_n=1024, core_split=2)
    loss_b = jax.block_until_ready(loss_b)
    ref_b = _semi_loss2_ref(current, output_b, ow_b, ou_b, target_b, weight)
    assert jnp.allclose(loss_b, ref_b, rtol=1e-5, atol=1e-5), (loss_b, ref_b)

    # ... and the output_u_w is None branch (supervised-only)
    loss_s = semi_loss2_forward(current, output, None, None, target, weight)
    loss_s = jax.block_until_ready(loss_s)
    ref_s = _semi_loss2_ref(current, output, None, None, target, weight)
    assert jnp.allclose(loss_s, ref_s, rtol=1e-5, atol=1e-5), (loss_s, ref_s)

    print("KERNEL_OK")
</pallas_src>

<mosaic_0001>
module attributes {stable_mosaic.version = 11 : i64} {
  func.func @_ce_kernel(%arg0: i32, %arg1: i32, %arg2: memref<3x8x1xf32, #tpu.memory_space<vmem>>, %arg3: memref<8x1xi32, #tpu.memory_space<vmem>>, %arg4: memref<3xf32, #tpu.memory_space<smem>>, %arg5: memref<8x128xf32, #tpu.memory_space<vmem>>, %arg6: memref<8x128xf32, #tpu.memory_space<vmem>>) attributes {dimension_semantics = [#tpu.dimension_semantics<parallel>, #tpu.dimension_semantics<arbitrary>], iteration_bounds = array<i64: 1, 1>, scalar_prefetch = 0 : i64, scratch_operands = 0 : i64, tpu.core_type = #tpu.core_type<tc>, window_params = [{transform_indices = @transform_0, window_bounds = array<i64: 3, 8, 1>}, {transform_indices = @transform_1, window_bounds = array<i64: 8, 1>}, {transform_indices = @transform_2, window_bounds = array<i64: 3>}, {transform_indices = @transform_3, window_bounds = array<i64: 8, 128>}, {transform_indices = @transform_4, window_bounds = array<i64: 8, 128>}]} {
    %c0_i32 = arith.constant 0 : i32
    %0 = arith.cmpi eq, %arg1, %c0_i32 : i32
    %1 = arith.extui %0 : i1 to i32
    %c0_i32_0 = arith.constant 0 : i32
    %2 = arith.cmpi ne, %1, %c0_i32_0 : i32
    scf.if %2 {
      %cst_27 = arith.constant 0.000000e+00 : f32
      %62 = vector.broadcast %cst_27 : f32 to vector<8x128xf32>
      %c0_28 = arith.constant 0 : index
      %c0_29 = arith.constant 0 : index
      %63 = vector.load %arg5[%c0_28, %c0_29] : memref<8x128xf32, #tpu.memory_space<vmem>>, vector<8x128xf32>
      tpu.vector_store %arg5[%c0_28, %c0_29], %62 {strides = array<i32>} : memref<8x128xf32, #tpu.memory_space<vmem>>, vector<8x128xf32>,
      %cst_30 = arith.constant 0.000000e+00 : f32
      %64 = vector.broadcast %cst_30 : f32 to vector<8x128xf32>
      %c0_31 = arith.constant 0 : index
      %c0_32 = arith.constant 0 : index
      %65 = vector.load %arg6[%c0_31, %c0_32] : memref<8x128xf32, #tpu.memory_space<vmem>>, vector<8x128xf32>
      tpu.vector_store %arg6[%c0_31, %c0_32], %64 {strides = array<i32>} : memref<8x128xf32, #tpu.memory_space<vmem>>, vector<8x128xf32>,
    } else {
    }
    %c0 = arith.constant 0 : index
    %c0_1 = arith.constant 0 : index
    %c0_2 = arith.constant 0 : index
    %3 = vector.load %arg2[%c0, %c0_1, %c0_2] : memref<3x8x1xf32, #tpu.memory_space<vmem>>, vector<1x8x1xf32>
    %4 = vector.shape_cast %3 : vector<1x8x1xf32> to vector<8x1xf32>
    %c1 = arith.constant 1 : index
    %c0_3 = arith.constant 0 : index
    %c0_4 = arith.constant 0 : index
    %5 = vector.load %arg2[%c1, %c0_3, %c0_4] : memref<3x8x1xf32, #tpu.memory_space<vmem>>, vector<1x8x1xf32>
    %6 = vector.shape_cast %5 : vector<1x8x1xf32> to vector<8x1xf32>
    %c2 = arith.constant 2 : index
    %c0_5 = arith.constant 0 : index
    %c0_6 = arith.constant 0 : index
    %7 = vector.load %arg2[%c2, %c0_5, %c0_6] : memref<3x8x1xf32, #tpu.memory_space<vmem>>, vector<1x8x1xf32>
    %8 = vector.shape_cast %7 : vector<1x8x1xf32> to vector<8x1xf32>
    %c0_7 = arith.constant 0 : index
    %c0_8 = arith.constant 0 : index
    %9 = vector.load %arg3[%c0_7, %c0_8] : memref<8x1xi32, #tpu.memory_space<vmem>>, vector<8x1xi32>
    %10 = arith.maximumf %4, %6 : vector<8x1xf32>
    %11 = arith.maximumf %10, %8 : vector<8x1xf32>
    %cst = arith.constant 0.000000e+00 : f32
    %12 = vector.broadcast %cst : f32 to vector<8x1xf32>
    %cst_9 = arith.constant 0.000000e+00 : f32
    %13 = vector.broadcast %cst_9 : f32 to vector<8x1xf32>
    %cst_10 = arith.constant 0.000000e+00 : f32
    %14 = vector.broadcast %cst_10 : f32 to vector<8x1xf32>
    %15 = arith.subf %4, %11 : vector<8x1xf32>
    %16 = math.exp %15 : vector<8x1xf32>
    %17 = arith.addf %12, %16 : vector<8x1xf32>
    %c0_i32_11 = arith.constant 0 : i32
    %18 = vector.broadcast %c0_i32_11 : i32 to vector<8x1xi32>
    %19 = arith.cmpi eq, %9, %18 : vector<8x1xi32>
    %20 = arith.select %19, %4, %13 : vector<8x1xi1>, vector<8x1xf32>
    %c0_12 = arith.constant 0 : index
    %21 = memref.load %arg4[%c0_12] : memref<3xf32, #tpu.memory_space<smem>>
    %22 = vector.broadcast %21 : f32 to vector<8x1xf32>
    %23 = arith.select %19, %22, %14 : vector<8x1xi1>, vector<8x1xf32>
    %24 = arith.subf %6, %11 : vector<8x1xf32>
    %25 = math.exp %24 : vector<8x1xf32>
    %26 = arith.addf %17, %25 : vector<8x1xf32>
    %c1_i32 = arith.constant 1 : i32
    %27 = vector.broadcast %c1_i32 : i32 to vector<8x1xi32>
    %28 = arith.cmpi eq, %9, %27 : vector<8x1xi32>
    %29 = arith.select %28, %6, %20 : vector<8x1xi1>, vector<8x1xf32>
    %c1_13 = arith.constant 1 : index
    %30 = memref.load %arg4[%c1_13] : memref<3xf32, #tpu.memory_space<smem>>
    %31 = vector.broadcast %30 : f32 to vector<8x1xf32>
    %32 = arith.select %28, %31, %23 : vector<8x1xi1>, vector<8x1xf32>
    %33 = arith.subf %8, %11 : vector<8x1xf32>
    %34 = math.exp %33 : vector<8x1xf32>
    %35 = arith.addf %26, %34 : vector<8x1xf32>
    %c2_i32 = arith.constant 2 : i32
    %36 = vector.broadcast %c2_i32 : i32 to vector<8x1xi32>
    %37 = arith.cmpi eq, %9, %36 : vector<8x1xi32>
    %38 = arith.select %37, %8, %29 : vector<8x1xi1>, vector<8x1xf32>
    %c2_14 = arith.constant 2 : index
    %39 = memref.load %arg4[%c2_14] : memref<3xf32, #tpu.memory_space<smem>>
    %40 = vector.broadcast %39 : f32 to vector<8x1xf32>
    %41 = arith.select %37, %40, %32 : vector<8x1xi1>, vector<8x1xf32>
    %42 = math.log %35 : vector<8x1xf32>
    %43 = arith.addf %42, %11 : vector<8x1xf32>
    %44 = arith.subf %43, %38 : vector<8x1xf32>
    %45 = arith.mulf %44, %41 : vector<8x1xf32>
    %c0_15 = arith.constant 0 : index
    %c0_16 = arith.constant 0 : index
    %46 = vector.load %arg5[%c0_15, %c0_16] : memref<8x128xf32, #tpu.memory_space<vmem>>, vector<8x128xf32>
    %cst_17 = arith.constant dense<0.000000e+00> : vector<8xf32>
    %47 = vector.multi_reduction <add>, %45, %cst_17 [1] : vector<8x1xf32> to vector<8xf32>
    %48 = vector.shape_cast %47 : vector<8xf32> to vector<8x1xf32>
    %cst_18 = arith.constant dense<0.000000e+00> : vector<1xf32>
    %49 = vector.multi_reduction <add>, %48, %cst_18 [0] : vector<8x1xf32> to vector<1xf32>
    %50 = vector.shape_cast %49 : vector<1xf32> to vector<1x1xf32>
    %51 = vector.broadcast %50 : vector<1x1xf32> to vector<8x128xf32>
    %52 = arith.addf %46, %51 : vector<8x128xf32>
    %c0_19 = arith.constant 0 : index
    %c0_20 = arith.constant 0 : index
    %53 = vector.load %arg5[%c0_19, %c0_20] : memref<8x128xf32, #tpu.memory_space<vmem>>, vector<8x128xf32>
    tpu.vector_store %arg5[%c0_19, %c0_20], %52 {strides = array<i32>} : memref<8x128xf32, #tpu.memory_space<vmem>>, vector<8x128xf32>,
    %c0_21 = arith.constant 0 : index
    %c0_22 = arith.constant 0 : index
    %54 = vector.load %arg6[%c0_21, %c0_22] : memref<8x128xf32, #tpu.memory_space<vmem>>, vector<8x128xf32>
    %cst_23 = arith.constant dense<0.000000e+00> : vector<8xf32>
    %55 = vector.multi_reduction <add>, %41, %cst_23 [1] : vector<8x1xf32> to vector<8xf32>
    %56 = vector.shape_cast %55 : vector<8xf32> to vector<8x1xf32>
    %cst_24 = arith.constant dense<0.000000e+00> : vector<1xf32>
    %57 = vector.multi_reduction <add>, %56, %cst_24 [0] : vector<8x1xf32> to vector<1xf32>
    %58 = vector.shape_cast %57 : vector<1xf32> to vector<1x1xf32>
    %59 = vector.broadcast %58 : vector<1x1xf32> to vector<8x128xf32>
    %60 = arith.addf %54, %59 : vector<8x128xf32>
    %c0_25 = arith.constant 0 : index
    %c0_26 = arith.constant 0 : index
    %61 = vector.load %arg6[%c0_25, %c0_26] : memref<8x128xf32, #tpu.memory_space<vmem>>, vector<8x128xf32>
    tpu.vector_store %arg6[%c0_25, %c0_26], %60 {strides = array<i32>} : memref<8x128xf32, #tpu.memory_space<vmem>>, vector<8x128xf32>,
    return
  }
  func.func @transform_0(%arg0: i32, %arg1: i32) -> (i32, i32, i32) {
    %c1_i32 = arith.constant 1 : i32
    %0 = arith.muli %arg0, %c1_i32 : i32
    %1 = arith.addi %0, %arg1 : i32
    %c0_i32 = arith.constant 0 : i32
    %c0_i32_0 = arith.constant 0 : i32
    %c0_i32_1 = arith.constant 0 : i32
    return %c0_i32, %c0_i32_0, %1 : i32, i32, i32
  }
  func.func @transform_1(%arg0: i32, %arg1: i32) -> (i32, i32) {
    %c1_i32 = arith.constant 1 : i32
    %0 = arith.muli %arg0, %c1_i32 : i32
    %1 = arith.addi %0, %arg1 : i32
    %c0_i32 = arith.constant 0 : i32
    %c0_i32_0 = arith.constant 0 : i32
    return %c0_i32, %1 : i32, i32
  }
  func.func @transform_2(%arg0: i32, %arg1: i32) -> i32 {
    %c0_i32 = arith.constant 0 : i32
    %c0_i32_0 = arith.constant 0 : i32
    return %c0_i32 : i32
  }
  func.func @transform_3(%arg0: i32, %arg1: i32) -> (i32, i32) {
    %c0_i32 = arith.constant 0 : i32
    %c0_i32_0 = arith.constant 0 : i32
    return %arg0, %c0_i32 : i32, i32
  }
  func.func @transform_4(%arg0: i32, %arg1: i32) -> (i32, i32) {
    %c0_i32 = arith.constant 0 : i32
    %c0_i32_0 = arith.constant 0 : i32
    return %arg0, %c0_i32 : i32, i32
  }
}

</mosaic_0001>

<llo_original>
// kernel: tpu_custom_call.1
$region0: #{tpu_custom_call.1}
  #allocation0 [shape = 'u32[]', space=smem, size = 0x4, offset = 0x4, fixed_abs, tag = 'smem constant byte address 0x4 - core index']
  #allocation1 [shape = 'u32[144,128]{1,0:T(1,128)}', space=vmem, size = 0x12000, scoped, tag = 'internal scratch']
  %s0 = inlined_call_operand.vmem [shape: f32[3,8,1], index: 0, kind: input, shape index: {}]
  %s1 = inlined_call_operand.vmem [shape: s32[8,1], index: 1, kind: input, shape index: {}]
  %s2 = inlined_call_operand.vmem [shape: f32[3], index: 2, kind: input, shape index: {}]
  %s3 = inlined_call_operand.hbm [shape: f32[8,128], index: 3, kind: output, shape index: {0}]
  %s4 = inlined_call_operand.hbm [shape: f32[8,128], index: 4, kind: output, shape index: {1}]
  %5 = xla_tuple %s3, %s4
  %s6 = sld [smem:[#allocation0]]
  $region38: #{tpu_custom_call.1} parent=0
    _
  %s8 = ssub.s32 1, %s6
  %s9 = scalar_select 0, %s8, %s6
  $region1: #{tpu_custom_call.1} parent=0
    #allocation2 [shape = 'u8[512]{0}', space=smem, size = 0x200, scoped, tag = 'input window, operand 2, single buffered']
    #allocation3 [shape = 's32[1]{0}', space=sflag, size = 0x4, scoped, tag = 'scoped memory for tpu_custom_call.1']
    #allocation4 [shape = 's32[1]{0}', space=sflag, size = 0x4, scoped, tag = 'scoped memory for tpu_custom_call.1']
    #allocation5 [shape = 'u8[4096]{0}', space=vmem, size = 0x1000, scoped, tag = 'output window, operand 0, single buffered']
    #allocation6 [shape = 'u8[4096]{0}', space=vmem, size = 0x1000, scoped, tag = 'output window, operand 1, single buffered']
    #allocation7 [shape = 's32[1]{0}', space=sflag, size = 0x4, scoped, tag = 'scoped memory for tpu_custom_call.1']
    %10 = vsyncpa [#allocation4], 0
    %11 = vsyncpa [#allocation3], 0
    %12 = vsyncpa [#allocation7], 0
    // Predicated region
    $region2: #{tpu_custom_call.1} parent=1 // pred_check
      _
    $region3: #{tpu_custom_call.1} parent=1 // pred_check_branch
      %14 = sbr.rel (0) target = $region5
    $region4: #{tpu_custom_call.1} parent=1 // pred_region
      %s15 = sadd.s32 0, 0
      %p16 = scmp.lt.s32.totalorder %s15, 0
      %s17 = scalar_select %p16, %s15, 0
      %s18 = smul.addr %s17, 8
      %s19 = scalar_lea.vmem %s0, %s18
      %s20 = sadd.s32 0, 0
    $region5: #{tpu_custom_call.1} parent=1 // pred_fallthru
      _
    // Predicated region
    $region6: #{tpu_custom_call.1} parent=1 // pred_check
      _
    $region7: #{tpu_custom_call.1} parent=1 // pred_check_branch
      %22 = sbr.rel (0) target = $region9
    $region8: #{tpu_custom_call.1} parent=1 // pred_region
      %s23 = sadd.s32 0, 0
      %p24 = scmp.lt.s32.totalorder %s23, 0
      %s25 = scalar_select %p24, %s23, 0
      %s26 = smul.addr %s25, 8
      %s27 = scalar_lea.vmem %s1, %s26
      %s28 = sadd.s32 0, 0
    $region9: #{tpu_custom_call.1} parent=1 // pred_fallthru
      _
    // Predicated region
    $region10: #{tpu_custom_call.1} parent=1 // pred_check
      _
    $region11: #{tpu_custom_call.1} parent=1 // pred_check_branch
      %30 = sbr.rel (0) target = $region13
    $region12: #{tpu_custom_call.1} parent=1 // pred_region
      %s32 = ssub.s32 16, 16
      %33 = vsyncadd [#allocation4], %s32
      %s35 = sshll.u32 %s2, 4
      %s36 = int_to_ptr.vmem [resolvable:$true] %s35
      %38 = dma.vmem_to_smem %s36, 16, [#allocation2], [#allocation4]
    $region13: #{tpu_custom_call.1} parent=1 // pred_fallthru
      _
    // Predicated region
    $region14: #{tpu_custom_call.1} parent=1 // pred_check
      _
    $region15: #{tpu_custom_call.1} parent=1 // pred_check_branch
      %40 = sbr.rel (0) target = $region17
    $region16: #{tpu_custom_call.1} parent=1 // pred_region
      %41 = dma.done [#allocation4], 16
    $region17: #{tpu_custom_call.1} parent=1 // pred_fallthru
      _
    %42 = sfence
    %s43 = sadd.s32 0, 0
    %p44 = scmp.lt.s32.totalorder %s43, 0
    %s45 = scalar_select %p44, %s43, 0
    %s46 = smul.addr %s45, 8
    %s47 = scalar_lea.vmem %s0, %s46
    %s48 = sadd.s32 0, 0
    %p49 = scmp.lt.s32.totalorder %s48, 0
    %s50 = scalar_select %p49, %s48, 0
    %s51 = smul.addr %s50, 8
    %s52 = scalar_lea.vmem %s1, %s51
    %s53 = sadd.s32 0, 0
    %p54 = scmp.lt.s32.totalorder %s53, 0
    %s55 = scalar_select %p54, %s53, 0
    %s56 = smul.addr %s55, 8
    %s57 = scalar_lea.vmem %s0, %s56
    %s58 = sadd.s32 0, 0
    %s59 = sadd.s32 0, 0
    %p60 = scmp.lt.s32.totalorder %s59, 0
    %s61 = scalar_select %p60, %s59, 0
    %s62 = smul.addr %s61, 8
    %s63 = scalar_lea.vmem %s1, %s62
    %s64 = sadd.s32 0, 0
    %p65 = scmp.eq.s32.totalorder 0, 0
    // Predicated region
    $region18: #{tpu_custom_call.1} parent=1 // pred_check
      %p66 = pneg %p65
    $region19: #{tpu_custom_call.1} parent=1 // pred_check_branch
      %68 = sbr.rel (%p66) target = $region21
    $region20: #{tpu_custom_call.1} parent=1 // pred_region
      %69 = vst [vmem:[#allocation5] sm:$0xff] 0.0
      %70 = vst [vmem:[#allocation6] sm:$0xff] 0.0
    $region21: #{tpu_custom_call.1} parent=1 // pred_fallthru
      _
    %v71 = vld [vmem:[%s57] sm:$0xff]
    %s72 = scalar_lea.vmem %s57, 8
    %v73 = vld [vmem:[%s72] sm:$0xff]
    %s74 = scalar_lea.vmem %s57, 16
    %v75 = vld [vmem:[%s74] sm:$0xff]
    %v76 = vld [vmem:[%s63] sm:$0xff]
    %v77 = vmax.f32 %v71, %v73
    %v78 = vmax.f32 %v77, %v75
    %v79 = vsub.f32 %v71, %v78
    %v80 = vmul.f32 %v79, 1.442695
    %v81 = vpow.pop %v80
    %v82 = vadd.f32 %v81, 0.0
    %vm83 = vcmp.eq.s32.totalorder %v76, 0
    %v84 = vsel %vm83, %v71, 0.0
    %s85 = sld [smem:[#allocation2]]
    %v86 = vstv %s85
    %v87 = vsel %vm83, %v86, 0.0
    %v88 = vsub.f32 %v73, %v78
    %v89 = vmul.f32 %v88, 1.442695
    %v90 = vpow.pop %v89
    %v91 = vadd.f32 %v82, %v90
    %vm92 = vcmp.eq.s32.totalorder %v76, 1
    %v93 = vsel %vm92, %v73, %v84
    %s94 = sld [smem:[#allocation2 + $0x1]]
    %v95 = vstv %s94
    %v96 = vsel %vm92, %v95, %v87
    %v97 = vsub.f32 %v75, %v78
    %v98 = vmul.f32 %v97, 1.442695
    %v99 = vpow.pop %v98
    %v100 = vadd.f32 %v91, %v99
    %vm101 = vcmp.eq.s32.totalorder %v76, 2
    %v102 = vsel %vm101, %v75, %v93
    %s103 = sld [smem:[#allocation2 + $0x2]]
    %v104 = vstv %s103
    %v105 = vsel %vm101, %v104, %v96
    %v106 = vlog2.pop %v100
    %v107 = vmul.f32 %v106, 0.6931472
    %v108 = vadd.f32 %v107, %v78
    %v109 = vsub.f32 %v108, %v102
    %v110 = vmul.f32 %v109, %v105
    %v111 = vld [vmem:[#allocation5] sm:$0xff]
    %v112 = vadd.f32 %v110, 0.0
    %vm113 = vcmask 7168
    %v114 = vsel %vm113, %v112, 0.0
    %v115 = vrot.slane %v114, 4
    %v116 = vadd.f32 %v114, %v115
    %v117 = vrot.slane %v116, 2
    %v118 = vadd.f32 %v116, %v117
    %v119 = vrot.slane %v118, 1
    %v120 = vadd.f32 %v118, %v119
    %122 = vset.pattern.permute.xlu0 0
    %123 = vperm.xlu0 %122, %v120
    %v124 = vpop.permute.xlu0 %123
    %v126 = vadd.f32 %v111, %v124
    %127 = vst [vmem:[#allocation5] sm:$0xff] %v126
    %v128 = vld [vmem:[#allocation6] sm:$0xff]
    %v129 = vadd.f32 %v105, 0.0
    %v130 = vsel %vm113, %v129, 0.0
    %v131 = vrot.slane %v130, 4
    %v132 = vadd.f32 %v130, %v131
    %v133 = vrot.slane %v132, 2
    %v134 = vadd.f32 %v132, %v133
    %v135 = vrot.slane %v134, 1
    %v136 = vadd.f32 %v134, %v135
    %138 = vset.pattern.permute.xlu0 0
    %139 = vperm.xlu0 %138, %v136
    %v140 = vpop.permute.xlu0 %139
    %v142 = vadd.f32 %v128, %v140
    %143 = vst [vmem:[#allocation6] sm:$0xff] %v142
    // Predicated region
    $region22: #{tpu_custom_call.1} parent=1 // pred_check
      _
    $region23: #{tpu_custom_call.1} parent=1 // pred_check_branch
      %145 = sbr.rel (0) target = $region25
    $region24: #{tpu_custom_call.1} parent=1 // pred_region
      %s147 = ssub.s32 128, 128
      %148 = vsyncadd [#allocation3], %s147
      %s150 = sshll.u32 [#allocation5], 4
      %s151 = int_to_ptr.vmem [resolvable:$true] %s150
      %153 = dma.vmem_to_hbm [thread:$0]  %s151, 128, %s3, [#allocation3]
    $region25: #{tpu_custom_call.1} parent=1 // pred_fallthru
      _
    // Predicated region
    $region26: #{tpu_custom_call.1} parent=1 // pred_check
      _
    $region27: #{tpu_custom_call.1} parent=1 // pred_check_branch
      %155 = sbr.rel (0) target = $region29
    $region28: #{tpu_custom_call.1} parent=1 // pred_region
      %s157 = ssub.s32 128, 128
      %158 = vsyncadd [#allocation7], %s157
      %s160 = sshll.u32 [#allocation6], 4
      %s161 = int_to_ptr.vmem [resolvable:$true] %s160
      %163 = dma.vmem_to_hbm [thread:$0]  %s161, 128, %s4, [#allocation7]
    $region29: #{tpu_custom_call.1} parent=1 // pred_fallthru
      _
    // Predicated region
    $region30: #{tpu_custom_call.1} parent=1 // pred_check
      _
    $region31: #{tpu_custom_call.1} parent=1 // pred_check_branch
      %165 = sbr.rel (0) target = $region33
    $region32: #{tpu_custom_call.1} parent=1 // pred_region
      %166 = dma.done [#allocation3], 128
    $region33: #{tpu_custom_call.1} parent=1 // pred_fallthru
      _
    // Predicated region
    $region34: #{tpu_custom_call.1} parent=1 // pred_check
      _
    $region35: #{tpu_custom_call.1} parent=1 // pred_check_branch
      %168 = sbr.rel (0) target = $region37
    $region36: #{tpu_custom_call.1} parent=1 // pred_region
      %169 = dma.done [#allocation7], 128
    $region37: #{tpu_custom_call.1} parent=1 // pred_fallthru
      _
    %170 = vsyncpa [#allocation3], 1
    %171 = vsyncpa [#allocation7], 1
    %172 = vsyncpa [#allocation4], 1

</llo_original>
